<compile_context>
chip_gen: v7x
topology: tpu7x:2x2x1
jax: 0.10.0
libtpu: 0.0.40
codegen_flags: <defaults>
</compile_context>

<pallas_src>
import functools

import jax
import jax.numpy as jnp
from jax.experimental import pallas as pl
from jax.experimental.pallas import tpu as pltpu


MXU_DTYPE = jnp.bfloat16      # MXU operand dtype (f32 accumulation everywhere)
ROW_ALIGN = 16                # bf16 packs 2 rows per sublane -> 16-row aligned tiles
TM_CAP = 1024                 # v6e tile sweep: 512->1024 still gains; keeps grid small


def _cdiv(a, b):
    return -(-a // b)


def _round_up(n, m):
    return _cdiv(n, m) * m


def _pad_to(x, shape):
    return jnp.pad(x, [(0, s - d) for d, s in zip(x.shape, shape)])


# ----------------------------------------------------------------------------
# Pallas kernel: fused classifier + embedding head
# ----------------------------------------------------------------------------
def _cls_head_kernel(x_ref, w1_ref, b1_ref, w2_ref, b2_ref, wf_ref, bf_ref,
                     o_ref, *, no_imgnorm, use_abs, mxu_dtype):
    """relu(x@W1+b1) -> relu(.@W2+b2) -> l2norm -> .@Wf+bf -> (l2norm) -> (abs).

    x_ref and weights are bf16 VMEM tiles; hidden/output feature dims are
    zero-padded to 128 lanes, so padded columns stay exactly zero through every
    layer and never change the math.  Rows [B:m_pad] pick up bias-derived
    garbage after ReLU — they are discarded by the out[:B] slice in the wrapper.
    """
    x = x_ref[...]                                    # bf16, no in-kernel cast

    # cls1: MXU matmul (bf16 in, f32 acc); bias + ReLU in f32 on the VPU.
    h = jnp.dot(x, w1_ref[...], preferred_element_type=jnp.float32) + b1_ref[...]
    h = jnp.maximum(h, 0.0)

    # cls2
    h = jnp.dot(h.astype(mxu_dtype), w2_ref[...],
                preferred_element_type=jnp.float32) + b2_ref[...]
    h = jnp.maximum(h, 0.0)

    # l2norm over features (dim=1).  rsqrt -> EUP slot; eps guards all-zero rows
    # (reference would NaN there instead — benign semantic difference).
    h = h * jax.lax.rsqrt(
        jnp.maximum(jnp.sum(h * h, axis=1, keepdims=True), 1e-24))

    # self.fc
    y = jnp.dot(h.astype(mxu_dtype), wf_ref[...],
                preferred_element_type=jnp.float32) + bf_ref[...]

    if not no_imgnorm:
        y = y * jax.lax.rsqrt(
            jnp.maximum(jnp.sum(y * y, axis=1, keepdims=True), 1e-24))
    if use_abs:
        y = jnp.abs(y)

    o_ref[...] = y.astype(o_ref.dtype)


def _choose_row_tiling(batch):
    """Pick (m_pad, tm).

    m_pad = round_up(B, 16) is fixed first, then tm is chosen so that the grid
    has >= 2 row tiles whenever there is more than one 16-row group (so v7x's
    two TensorCores both get work) while capping tiles at TM_CAP rows.  Wasted
    rows are bounded by one ROW_ALIGN group (old scheme could waste ~2x).
    """
    m_min = _round_up(max(batch, 1), ROW_ALIGN)
    if m_min <= ROW_ALIGN:
        return m_min, m_min                       # tiny batch: one small tile
    n_tiles = max(2, _cdiv(m_min, TM_CAP))
    tm = _round_up(_cdiv(m_min, n_tiles), ROW_ALIGN)
    m_pad = _round_up(m_min, tm)
    return m_pad, tm


def _vmem_cap_bytes():
    """Generation-aware ceiling: ~3/4 of physical VMEM (128 MiB on v5e/v6e,
    64 MiB on v7x); falls back to the v7x-safe 48 MiB if the query fails."""
    try:
        phys = pltpu.get_tpu_info().vmem_capacity_bytes
    except Exception:                 # best-effort hardware query
        phys = 64 * 1024 * 1024
    return int(phys) * 3 // 4


def _nbytes(a):
    return int(a.size) * a.dtype.itemsize


def pallas_classifier_head(x, prep, *, no_imgnorm, use_abs,
                           mxu_dtype=MXU_DTYPE):
    """Fused classifier + head.  x:[B,K] bf16 -> [m_pad,n_pad] f32 (slice outside)."""
    B, K = x.shape
    k_pad = prep["w1"].shape[0]
    n_pad = prep["wf"].shape[1]

    m_pad, tm = _choose_row_tiling(B)

    x = x.astype(mxu_dtype)                       # no-op when already bf16
    if (m_pad, k_pad) != (B, K):
        # Row (and, if ever needed, lane) pad only when required; under jit it
        # fuses with the flatten/cast so the activation hits HBM exactly once.
        x = _pad_to(x, (m_pad, k_pad))

    # Generation-aware VMEM budget: actual (double-buffered) tile + weight bytes
    # with 2x headroom, capped at ~3/4 of this chip's physical VMEM.
    weight_bytes = sum(_nbytes(prep[k])
                       for k in ("w1", "b1", "w2", "b2", "wf", "bf"))
    est = 2 * (tm * k_pad * 2 + tm * n_pad * 4) + 2 * weight_bytes
    vmem_limit = min(max(4 * 1024 * 1024, 2 * est), _vmem_cap_bytes())

    kernel = functools.partial(_cls_head_kernel, no_imgnorm=no_imgnorm,
                               use_abs=use_abs, mxu_dtype=mxu_dtype)
    # TODO(synk): at real VGG19 classifier sizes (cls1 = 25088x4096, ~205 MB
    # bf16) the all-weights-resident layout must become a K-reduction grid axis
    # ("arbitrary", innermost) + f32 accumulator scratch + pl.when
    # init/finalize, with N-tiling for wf and pl.Buffered(1) on the
    # constant-index weight specs; it would not fit v7x's 64 MiB VMEM as-is.
    return pl.pallas_call(
        kernel,
        grid=(m_pad // tm,),
        in_specs=[
            pl.BlockSpec((tm, k_pad), lambda i: (i, 0)),
            pl.BlockSpec(prep["w1"].shape, lambda i: (0, 0)),
            pl.BlockSpec(prep["b1"].shape, lambda i: (0, 0)),
            pl.BlockSpec(prep["w2"].shape, lambda i: (0, 0)),
            pl.BlockSpec(prep["b2"].shape, lambda i: (0, 0)),
            pl.BlockSpec(prep["wf"].shape, lambda i: (0, 0)),
            pl.BlockSpec(prep["bf"].shape, lambda i: (0, 0)),
        ],
        out_specs=pl.BlockSpec((tm, n_pad), lambda i: (i, 0)),
        out_shape=jax.ShapeDtypeStruct((m_pad, n_pad), jnp.float32),
        compiler_params=pltpu.CompilerParams(
            dimension_semantics=("parallel",),     # v7x: both TCs take row tiles
            vmem_limit_bytes=vmem_limit),
    )(x, prep["w1"], prep["b1"], prep["w2"], prep["b2"],
      prep["wf"], prep["bf"])


# ----------------------------------------------------------------------------
# Conv backbone (channels-last XLA conv, per perf review)
# ----------------------------------------------------------------------------
def conv3x3_relu_nhwc(x, w_hwio, b):
    """3x3 SAME conv + bias + ReLU.  x:[B,H,W,Cin], w:[3,3,Cin,Cout], b:[Cout]."""
    y = jax.lax.conv_general_dilated(
        x, w_hwio, window_strides=(1, 1), padding="SAME",
        dimension_numbers=("NHWC", "HWIO", "NHWC"))
    return jnp.maximum(y + b.reshape(1, 1, 1, -1), 0.0)


def maxpool2x2_nhwc(x):
    B, H, W, C = x.shape
    return x.reshape(B, H // 2, 2, W // 2, 2, C).max(axis=(2, 4))


# (NCHW versions kept only for the pure-JAX reference in PyTorch layout.)
def conv3x3_relu_nchw(x, w_oihw, b):
    y = jax.lax.conv_general_dilated(
        x, w_oihw, window_strides=(1, 1), padding="SAME",
        dimension_numbers=("NCHW", "OIHW", "NCHW"))
    return jnp.maximum(y + b.reshape(1, -1, 1, 1), 0.0)


def maxpool2x2_nchw(x):
    B, C, H, W = x.shape
    return x.reshape(B, C, H // 2, 2, W // 2, 2).max(axis=(3, 5))


# ----------------------------------------------------------------------------
# Parameters
# ----------------------------------------------------------------------------
def init_params(key, embed_size):
    """Deterministic synthetic parameters (shapes mirror a scaled-down VGG),
    stored in PyTorch layout (OIHW conv weights, [out,in] linear weights)."""
    ks = jax.random.split(key, 8)
    p = {}
    p["conv1_w"] = 0.05 * jax.random.normal(ks[0], (8, 3, 3, 3), jnp.float32)
    p["conv1_b"] = jnp.zeros((8,), jnp.float32)
    p["conv2_w"] = 0.05 * jax.random.normal(ks[1], (8, 8, 3, 3), jnp.float32)
    p["conv2_b"] = jnp.zeros((8,), jnp.float32)
    p["conv3_w"] = 0.05 * jax.random.normal(ks[2], (16, 8, 3, 3), jnp.float32)
    p["conv3_b"] = jnp.zeros((16,), jnp.float32)
    # classifier (last Linear removed by the module -> feature dim = 64)
    p["cls1_w"] = 0.05 * jax.random.normal(ks[3], (64, 16 * 4 * 4), jnp.float32)
    p["cls1_b"] = jnp.zeros((64,), jnp.float32)
    p["cls2_w"] = 0.05 * jax.random.normal(ks[4], (64, 64), jnp.float32)
    p["cls2_b"] = jnp.zeros((64,), jnp.float32)
    # self.fc : Xavier-uniform as in init_weights()
    in_f, out_f = 64, embed_size
    r = jnp.sqrt(6.0) / jnp.sqrt(in_f + out_f)
    p["fc_w"] = jax.random.uniform(ks[5], (out_f, in_f), jnp.float32, -r, r)
    p["fc_b"] = jnp.zeros((out_f,), jnp.float32)
    return p


def prepare_params(params, *, feat_chw=(16, 4, 4), mxu_dtype=MXU_DTYPE):
    """One-time param prep (hoisted out of the forward):
      * conv weights OIHW -> HWIO for the channels-last backbone;
      * cls1_w columns permuted from the PyTorch (c,h,w) flatten order to the
        NHWC (h,w,c) flatten order of the new backbone;
      * classifier / fc weights transposed, zero-padded to (8,128)-friendly
        shapes, and cast to bf16 for the MXU; biases stay f32.
    Zero padding is mathematically inert (padded columns stay 0 end-to-end).
    """
    C, Hf, Wf = feat_chw
    h1, k1 = params["cls1_w"].shape            # (64, C*Hf*Wf)
    h2 = params["cls2_w"].shape[0]
    e = params["fc_w"].shape[0]
    k1p, h1p = _round_up(k1, 128), _round_up(h1, 128)
    h2p, ep = _round_up(h2, 128), _round_up(e, 128)

    prep = {}
    for name in ("conv1", "conv2", "conv3"):
        prep[name + "_w"] = jnp.transpose(params[name + "_w"], (2, 3, 1, 0))
        prep[name + "_b"] = params[name + "_b"]

    w1_nhwc = (params["cls1_w"].reshape(h1, C, Hf, Wf)
               .transpose(0, 2, 3, 1).reshape(h1, k1))   # columns -> (h, w, c)
    prep["w1"] = _pad_to(w1_nhwc.T, (k1p, h1p)).astype(mxu_dtype)
    prep["b1"] = _pad_to(params["cls1_b"].reshape(1, -1), (1, h1p))
    prep["w2"] = _pad_to(params["cls2_w"].T, (h1p, h2p)).astype(mxu_dtype)
    prep["b2"] = _pad_to(params["cls2_b"].reshape(1, -1), (1, h2p))
    prep["wf"] = _pad_to(params["fc_w"].T, (h2p, ep)).astype(mxu_dtype)
    prep["bf"] = _pad_to(params["fc_b"].reshape(1, -1), (1, ep))
    return prep


# ----------------------------------------------------------------------------
# Forward
# ----------------------------------------------------------------------------
def encoder_image_full_forward(images, prep, *, embed_size,
                               no_imgnorm=False, use_abs=False):
    """forward(images): features = cnn(images); l2norm; fc; l2norm; (abs).

    `images` is NCHW (PyTorch layout); the backbone runs channels-last.
    """
    x = jnp.transpose(images, (0, 2, 3, 1))                        # NCHW -> NHWC
    x = conv3x3_relu_nhwc(x, prep["conv1_w"], prep["conv1_b"])     # [B,16,16,8]
    x = conv3x3_relu_nhwc(x, prep["conv2_w"], prep["conv2_b"])     # [B,16,16,8]
    x = maxpool2x2_nhwc(x)                                         # [B,8,8,8]
    x = conv3x3_relu_nhwc(x, prep["conv3_w"], prep["conv3_b"])     # [B,8,8,16]
    x = maxpool2x2_nhwc(x)                                         # [B,4,4,16]
    B = x.shape[0]
    # Flatten (h,w,c) + bf16 cast: fuses into the conv epilogue, so the
    # activation streamed into the Pallas head is written to HBM once, at half
    # the bytes.  Dropout in the VGG classifier = identity in eval.
    feats = x.reshape(B, -1).astype(MXU_DTYPE)                     # [B,256] bf16
    out = pallas_classifier_head(feats, prep,
                                 no_imgnorm=no_imgnorm, use_abs=use_abs)
    return out[:B, :embed_size]                                    # strip padding


def reference_forward(images, params, *, no_imgnorm=False, use_abs=False):
    """Pure-JAX f32 reference in the original PyTorch layout / flatten order."""
    x = conv3x3_relu_nchw(images, params["conv1_w"], params["conv1_b"])
    x = conv3x3_relu_nchw(x, params["conv2_w"], params["conv2_b"])
    x = maxpool2x2_nchw(x)
    x = conv3x3_relu_nchw(x, params["conv3_w"], params["conv3_b"])
    x = maxpool2x2_nchw(x)
    B = x.shape[0]
    x = x.reshape(B, -1)
    x = jnp.maximum(x @ params["cls1_w"].T + params["cls1_b"], 0.0)
    f = jnp.maximum(x @ params["cls2_w"].T + params["cls2_b"], 0.0)
    f = f / jnp.sqrt(jnp.sum(f * f, axis=1, keepdims=True))
    y = f @ params["fc_w"].T + params["fc_b"]
    if not no_imgnorm:
        y = y / jnp.sqrt(jnp.sum(y * y, axis=1, keepdims=True))
    if use_abs:
        y = jnp.abs(y)
    return y


if __name__ == "__main__":
    embed_size = 32
    key = jax.random.PRNGKey(0)
    k_img, k_par = jax.random.split(key)
    images = jax.random.normal(k_img, (2, 3, 16, 16), jnp.float32)   # NCHW
    params = init_params(k_par, embed_size)
    prep = prepare_params(params, feat_chw=(16, 4, 4))   # transposes/pads/casts hoisted

    fwd = jax.jit(functools.partial(encoder_image_full_forward,
                                    embed_size=embed_size,
                                    no_imgnorm=False, use_abs=False))
    out = jax.block_until_ready(fwd(images, prep))

    assert out.shape == (2, embed_size) and out.dtype == jnp.float32
    # with no_imgnorm=False every row is unit-L2-norm (normalization done in f32)
    assert bool(jnp.all(jnp.abs(jnp.sum(out * out, axis=1) - 1.0) < 1e-4))
    # matches the pure-f32 NCHW reference up to bf16 MXU rounding
    ref = reference_forward(images, params, no_imgnorm=False, use_abs=False)
    assert bool(jnp.allclose(out, ref, atol=3e-2, rtol=0.0))
    print("KERNEL_OK")
</pallas_src>

<mosaic_0001>
module attributes {stable_mosaic.version = 11 : i64} {
  func.func @_cls_head_kernel(%arg0: i32, %arg1: memref<16x256xbf16, #tpu.memory_space<vmem>>, %arg2: memref<256x128xbf16, #tpu.memory_space<vmem>>, %arg3: memref<1x128xf32, #tpu.memory_space<vmem>>, %arg4: memref<128x128xbf16, #tpu.memory_space<vmem>>, %arg5: memref<1x128xf32, #tpu.memory_space<vmem>>, %arg6: memref<128x128xbf16, #tpu.memory_space<vmem>>, %arg7: memref<1x128xf32, #tpu.memory_space<vmem>>, %arg8: memref<16x128xf32, #tpu.memory_space<vmem>>) attributes {dimension_semantics = [#tpu.dimension_semantics<parallel>], iteration_bounds = array<i64: 1>, scalar_prefetch = 0 : i64, scratch_operands = 0 : i64, tpu.core_type = #tpu.core_type<tc>, window_params = [{transform_indices = @transform_0, window_bounds = array<i64: 16, 256>}, {pipeline_mode = #tpu.pipeline_mode<synchronous>, transform_indices = @transform_1, window_bounds = array<i64: 256, 128>}, {pipeline_mode = #tpu.pipeline_mode<synchronous>, transform_indices = @transform_2, window_bounds = array<i64: 1, 128>}, {pipeline_mode = #tpu.pipeline_mode<synchronous>, transform_indices = @transform_3, window_bounds = array<i64: 128, 128>}, {pipeline_mode = #tpu.pipeline_mode<synchronous>, transform_indices = @transform_4, window_bounds = array<i64: 1, 128>}, {pipeline_mode = #tpu.pipeline_mode<synchronous>, transform_indices = @transform_5, window_bounds = array<i64: 128, 128>}, {pipeline_mode = #tpu.pipeline_mode<synchronous>, transform_indices = @transform_6, window_bounds = array<i64: 1, 128>}, {transform_indices = @transform_7, window_bounds = array<i64: 16, 128>}]} {
    %c0 = arith.constant 0 : index
    %c0_0 = arith.constant 0 : index
    %0 = vector.load %arg1[%c0, %c0_0] : memref<16x256xbf16, #tpu.memory_space<vmem>>, vector<16x256xbf16>
    %c0_1 = arith.constant 0 : index
    %c0_2 = arith.constant 0 : index
    %1 = vector.load %arg2[%c0_1, %c0_2] : memref<256x128xbf16, #tpu.memory_space<vmem>>, vector<256x128xbf16>
    %cst = arith.constant dense<0.000000e+00> : vector<16x128xf32>
    %2 = tpu.matmul %0, %1, %cst {dimension_numbers = #tpu.dot_dimension_numbers<[1], [0], [0], [1], [0, 0, 1, 1], [], []>} : vector<16x256xbf16>, vector<256x128xbf16>, vector<16x128xf32> -> vector<16x128xf32>
    %c0_3 = arith.constant 0 : index
    %c0_4 = arith.constant 0 : index
    %3 = vector.load %arg3[%c0_3, %c0_4] : memref<1x128xf32, #tpu.memory_space<vmem>>, vector<1x128xf32>
    %4 = vector.broadcast %3 : vector<1x128xf32> to vector<16x128xf32>
    %5 = arith.addf %2, %4 : vector<16x128xf32>
    %cst_5 = arith.constant 0.000000e+00 : f32
    %6 = vector.broadcast %cst_5 : f32 to vector<16x128xf32>
    %7 = arith.maximumf %5, %6 : vector<16x128xf32>
    %8 = arith.truncf %7 : vector<16x128xf32> to vector<16x128xbf16>
    %c0_6 = arith.constant 0 : index
    %c0_7 = arith.constant 0 : index
    %9 = vector.load %arg4[%c0_6, %c0_7] : memref<128x128xbf16, #tpu.memory_space<vmem>>, vector<128x128xbf16>
    %cst_8 = arith.constant dense<0.000000e+00> : vector<16x128xf32>
    %10 = tpu.matmul %8, %9, %cst_8 {dimension_numbers = #tpu.dot_dimension_numbers<[1], [0], [0], [1], [0, 0, 1, 1], [], []>} : vector<16x128xbf16>, vector<128x128xbf16>, vector<16x128xf32> -> vector<16x128xf32>
    %c0_9 = arith.constant 0 : index
    %c0_10 = arith.constant 0 : index
    %11 = vector.load %arg5[%c0_9, %c0_10] : memref<1x128xf32, #tpu.memory_space<vmem>>, vector<1x128xf32>
    %12 = vector.broadcast %11 : vector<1x128xf32> to vector<16x128xf32>
    %13 = arith.addf %10, %12 : vector<16x128xf32>
    %cst_11 = arith.constant 0.000000e+00 : f32
    %14 = vector.broadcast %cst_11 : f32 to vector<16x128xf32>
    %15 = arith.maximumf %13, %14 : vector<16x128xf32>
    %16 = arith.mulf %15, %15 : vector<16x128xf32>
    %cst_12 = arith.constant dense<0.000000e+00> : vector<16xf32>
    %17 = vector.multi_reduction <add>, %16, %cst_12 [1] : vector<16x128xf32> to vector<16xf32>
    %18 = vector.shape_cast %17 : vector<16xf32> to vector<16x1xf32>
    %cst_13 = arith.constant 1.000000e-24 : f32
    %19 = vector.broadcast %cst_13 : f32 to vector<16x1xf32>
    %20 = arith.maximumf %18, %19 : vector<16x1xf32>
    %21 = math.rsqrt %20 : vector<16x1xf32>
    %22 = vector.broadcast %21 : vector<16x1xf32> to vector<16x128xf32>
    %23 = arith.mulf %15, %22 : vector<16x128xf32>
    %24 = arith.truncf %23 : vector<16x128xf32> to vector<16x128xbf16>
    %c0_14 = arith.constant 0 : index
    %c0_15 = arith.constant 0 : index
    %25 = vector.load %arg6[%c0_14, %c0_15] : memref<128x128xbf16, #tpu.memory_space<vmem>>, vector<128x128xbf16>
    %cst_16 = arith.constant dense<0.000000e+00> : vector<16x128xf32>
    %26 = tpu.matmul %24, %25, %cst_16 {dimension_numbers = #tpu.dot_dimension_numbers<[1], [0], [0], [1], [0, 0, 1, 1], [], []>} : vector<16x128xbf16>, vector<128x128xbf16>, vector<16x128xf32> -> vector<16x128xf32>
    %c0_17 = arith.constant 0 : index
    %c0_18 = arith.constant 0 : index
    %27 = vector.load %arg7[%c0_17, %c0_18] : memref<1x128xf32, #tpu.memory_space<vmem>>, vector<1x128xf32>
    %28 = vector.broadcast %27 : vector<1x128xf32> to vector<16x128xf32>
    %29 = arith.addf %26, %28 : vector<16x128xf32>
    %30 = arith.mulf %29, %29 : vector<16x128xf32>
    %cst_19 = arith.constant dense<0.000000e+00> : vector<16xf32>
    %31 = vector.multi_reduction <add>, %30, %cst_19 [1] : vector<16x128xf32> to vector<16xf32>
    %32 = vector.shape_cast %31 : vector<16xf32> to vector<16x1xf32>
    %cst_20 = arith.constant 1.000000e-24 : f32
    %33 = vector.broadcast %cst_20 : f32 to vector<16x1xf32>
    %34 = arith.maximumf %32, %33 : vector<16x1xf32>
    %35 = math.rsqrt %34 : vector<16x1xf32>
    %36 = vector.broadcast %35 : vector<16x1xf32> to vector<16x128xf32>
    %37 = arith.mulf %29, %36 : vector<16x128xf32>
    %c0_21 = arith.constant 0 : index
    %c0_22 = arith.constant 0 : index
    %38 = vector.load %arg8[%c0_21, %c0_22] : memref<16x128xf32, #tpu.memory_space<vmem>>, vector<16x128xf32>
    tpu.vector_store %arg8[%c0_21, %c0_22], %37 {strides = array<i32>} : memref<16x128xf32, #tpu.memory_space<vmem>>, vector<16x128xf32>,
    return
  }
  func.func @transform_0(%arg0: i32) -> (i32, i32) {
    %c0_i32 = arith.constant 0 : i32
    %c0_i32_0 = arith.constant 0 : i32
    return %arg0, %c0_i32 : i32, i32
  }
  func.func @transform_1(%arg0: i32) -> (i32, i32) {
    %c0_i32 = arith.constant 0 : i32
    %c0_i32_0 = arith.constant 0 : i32
    %c0_i32_1 = arith.constant 0 : i32
    return %c0_i32, %c0_i32_0 : i32, i32
  }
  func.func @transform_2(%arg0: i32) -> (i32, i32) {
    %c0_i32 = arith.constant 0 : i32
    %c0_i32_0 = arith.constant 0 : i32
    %c0_i32_1 = arith.constant 0 : i32
    return %c0_i32, %c0_i32_0 : i32, i32
  }
  func.func @transform_3(%arg0: i32) -> (i32, i32) {
    %c0_i32 = arith.constant 0 : i32
    %c0_i32_0 = arith.constant 0 : i32
    %c0_i32_1 = arith.constant 0 : i32
    return %c0_i32, %c0_i32_0 : i32, i32
  }
  func.func @transform_4(%arg0: i32) -> (i32, i32) {
    %c0_i32 = arith.constant 0 : i32
    %c0_i32_0 = arith.constant 0 : i32
    %c0_i32_1 = arith.constant 0 : i32
    return %c0_i32, %c0_i32_0 : i32, i32
  }
  func.func @transform_5(%arg0: i32) -> (i32, i32) {
    %c0_i32 = arith.constant 0 : i32
    %c0_i32_0 = arith.constant 0 : i32
    %c0_i32_1 = arith.constant 0 : i32
    return %c0_i32, %c0_i32_0 : i32, i32
  }
  func.func @transform_6(%arg0: i32) -> (i32, i32) {
    %c0_i32 = arith.constant 0 : i32
    %c0_i32_0 = arith.constant 0 : i32
    %c0_i32_1 = arith.constant 0 : i32
    return %c0_i32, %c0_i32_0 : i32, i32
  }
  func.func @transform_7(%arg0: i32) -> (i32, i32) {
    %c0_i32 = arith.constant 0 : i32
    %c0_i32_0 = arith.constant 0 : i32
    return %arg0, %c0_i32 : i32, i32
  }
}

</mosaic_0001>

<llo_original>
// kernel: encoder_image_full_forward.1
$region0: #{encoder_image_full_forward.1}
  #allocation0 [shape = 'u32[]', space=smem, size = 0x4, offset = 0x4, fixed_abs, tag = 'smem constant byte address 0x4 - core index']
  #allocation1 [shape = 'u32[144,128]{1,0:T(1,128)}', space=vmem, size = 0x12000, scoped, tag = 'internal scratch']
  %s0 = inlined_call_operand.vmem [shape: bf16[16,256], index: 0, kind: input, shape index: {}]
  %s1 = inlined_call_operand.vmem [shape: bf16[256,128], index: 1, kind: input, shape index: {}]
  %s2 = inlined_call_operand.vmem [shape: f32[1,128], index: 2, kind: input, shape index: {}]
  %s3 = inlined_call_operand.vmem [shape: bf16[128,128], index: 3, kind: input, shape index: {}]
  %s4 = inlined_call_operand.vmem [shape: f32[1,128], index: 4, kind: input, shape index: {}]
  %s5 = inlined_call_operand.vmem [shape: bf16[128,128], index: 5, kind: input, shape index: {}]
  %s6 = inlined_call_operand.vmem [shape: f32[1,128], index: 6, kind: input, shape index: {}]
  %s7 = inlined_call_operand.vmem [shape: f32[16,128], index: 7, kind: output, shape index: {}]
  %s8 = sld [smem:[#allocation0]]
  $region38: #{encoder_image_full_forward.1} parent=0
    _
  %s10 = ssub.s32 1, %s8
  %s11 = scalar_select 0, %s10, %s8
  // Predicated region
  $region2: #{encoder_image_full_forward.1} parent=0 // pred_check
    _
  $region3: #{encoder_image_full_forward.1} parent=0 // pred_check_branch
    %13 = sbr.rel (0) target = $region5
  $region4: #{encoder_image_full_forward.1} parent=0 // pred_region
    _
  $region5: #{encoder_image_full_forward.1} parent=0 // pred_fallthru
    _
  // Predicated region
  $region6: #{encoder_image_full_forward.1} parent=0 // pred_check
    _
  $region7: #{encoder_image_full_forward.1} parent=0 // pred_check_branch
    %15 = sbr.rel (0) target = $region9
  $region8: #{encoder_image_full_forward.1} parent=0 // pred_region
    _
  $region9: #{encoder_image_full_forward.1} parent=0 // pred_fallthru
    _
  // Predicated region
  $region10: #{encoder_image_full_forward.1} parent=0 // pred_check
    _
  $region11: #{encoder_image_full_forward.1} parent=0 // pred_check_branch
    %17 = sbr.rel (0) target = $region13
  $region12: #{encoder_image_full_forward.1} parent=0 // pred_region
    _
  $region13: #{encoder_image_full_forward.1} parent=0 // pred_fallthru
    _
  // Predicated region
  $region14: #{encoder_image_full_forward.1} parent=0 // pred_check
    _
  $region15: #{encoder_image_full_forward.1} parent=0 // pred_check_branch
    %19 = sbr.rel (0) target = $region17
  $region16: #{encoder_image_full_forward.1} parent=0 // pred_region
    _
  $region17: #{encoder_image_full_forward.1} parent=0 // pred_fallthru
    _
  // Predicated region
  $region18: #{encoder_image_full_forward.1} parent=0 // pred_check
    _
  $region19: #{encoder_image_full_forward.1} parent=0 // pred_check_branch
    %21 = sbr.rel (0) target = $region21
  $region20: #{encoder_image_full_forward.1} parent=0 // pred_region
    _
  $region21: #{encoder_image_full_forward.1} parent=0 // pred_fallthru
    _
  // Predicated region
  $region22: #{encoder_image_full_forward.1} parent=0 // pred_check
    _
  $region23: #{encoder_image_full_forward.1} parent=0 // pred_check_branch
    %23 = sbr.rel (0) target = $region25
  $region24: #{encoder_image_full_forward.1} parent=0 // pred_region
    _
  $region25: #{encoder_image_full_forward.1} parent=0 // pred_fallthru
    _
  // Predicated region
  $region26: #{encoder_image_full_forward.1} parent=0 // pred_check
    _
  $region27: #{encoder_image_full_forward.1} parent=0 // pred_check_branch
    %25 = sbr.rel (0) target = $region29
  $region28: #{encoder_image_full_forward.1} parent=0 // pred_region
    _
  $region29: #{encoder_image_full_forward.1} parent=0 // pred_fallthru
    _
  %v27 = vld [vmem:[%s0] sm:$0xff]
  %v28 = vld [vmem:[%s0 + $0x8] sm:$0xff]
  %v29 = vld [vmem:[%s1] sm:$0xf]
  %v30 = vld [vmem:[%s1 + $0x4] sm:$0xf]
  %v31 = vld [vmem:[%s1 + $0x8] sm:$0xf]
  %v32 = vld [vmem:[%s1 + $0xc] sm:$0xf]
  %v33 = vld [vmem:[%s1 + $0x10] sm:$0xf]
  %v34 = vld [vmem:[%s1 + $0x14] sm:$0xf]
  %v35 = vld [vmem:[%s1 + $0x18] sm:$0xf]
  %v36 = vld [vmem:[%s1 + $0x1c] sm:$0xf]
  %v37 = vld [vmem:[%s1 + $0x20] sm:$0xf]
  %v38 = vld [vmem:[%s1 + $0x24] sm:$0xf]
  %v39 = vld [vmem:[%s1 + $0x28] sm:$0xf]
  %v40 = vld [vmem:[%s1 + $0x2c] sm:$0xf]
  %v41 = vld [vmem:[%s1 + $0x30] sm:$0xf]
  %v42 = vld [vmem:[%s1 + $0x34] sm:$0xf]
  %v43 = vld [vmem:[%s1 + $0x38] sm:$0xf]
  %v44 = vld [vmem:[%s1 + $0x3c] sm:$0xf]
  %v45 = vld [vmem:[%s1 + $0x40] sm:$0xf]
  %v46 = vld [vmem:[%s1 + $0x44] sm:$0xf]
  %v47 = vld [vmem:[%s1 + $0x48] sm:$0xf]
  %v48 = vld [vmem:[%s1 + $0x4c] sm:$0xf]
  %v49 = vld [vmem:[%s1 + $0x50] sm:$0xf]
  %v50 = vld [vmem:[%s1 + $0x54] sm:$0xf]
  %v51 = vld [vmem:[%s1 + $0x58] sm:$0xf]
  %v52 = vld [vmem:[%s1 + $0x5c] sm:$0xf]
  %v53 = vld [vmem:[%s1 + $0x60] sm:$0xf]
  %v54 = vld [vmem:[%s1 + $0x64] sm:$0xf]
  %v55 = vld [vmem:[%s1 + $0x68] sm:$0xf]
  %v56 = vld [vmem:[%s1 + $0x6c] sm:$0xf]
  %v57 = vld [vmem:[%s1 + $0x70] sm:$0xf]
  %v58 = vld [vmem:[%s1 + $0x74] sm:$0xf]
  %v59 = vld [vmem:[%s1 + $0x78] sm:$0xf]
  %v60 = vld [vmem:[%s1 + $0x7c] sm:$0xf]
  %v61 = vld [vmem:[%s2] sm:$0x1]
  %v63 = vlaneseq
  %v64 = vshrl.u32 %v63, 7
  %v65 = vsub.s32 0, %v64
  %v66 = vrot.slane %v61, %v65
  %v70 = vunpack.c.l.b16 %v27
  %v71 = vunpack.c.h.b16 %v27
  %v72 = vunpack.c.l.b16 %v28
  %v73 = vunpack.c.h.b16 %v28
  %v74 = vpack.c.b16 %v72, %v70
  %v75 = vpack.c.b16 %v73, %v71
  %v110 = vunpack.c.l.b16 %v29
  %v111 = vunpack.c.l.b16 %v30
  %v112 = vunpack.c.l.b16 %v31
  %v113 = vunpack.c.l.b16 %v32
  %v114 = vunpack.c.l.b16 %v33
  %v115 = vunpack.c.l.b16 %v34
  %v116 = vunpack.c.l.b16 %v35
  %v117 = vunpack.c.l.b16 %v36
  %v118 = vunpack.c.l.b16 %v37
  %v119 = vunpack.c.l.b16 %v38
  %v120 = vunpack.c.l.b16 %v39
  %v121 = vunpack.c.l.b16 %v40
  %v122 = vunpack.c.l.b16 %v41
  %v123 = vunpack.c.l.b16 %v42
  %v124 = vunpack.c.l.b16 %v43
  %v125 = vunpack.c.l.b16 %v44
  %v126 = vunpack.c.l.b16 %v45
  %v127 = vunpack.c.l.b16 %v46
  %v128 = vunpack.c.l.b16 %v47
  %v129 = vunpack.c.l.b16 %v48
  %v130 = vunpack.c.l.b16 %v49
  %v131 = vunpack.c.l.b16 %v50
  %v132 = vunpack.c.l.b16 %v51
  %v133 = vunpack.c.l.b16 %v52
  %v134 = vunpack.c.l.b16 %v53
  %v135 = vunpack.c.l.b16 %v54
  %v136 = vunpack.c.l.b16 %v55
  %v137 = vunpack.c.l.b16 %v56
  %v138 = vunpack.c.l.b16 %v57
  %v139 = vunpack.c.l.b16 %v58
  %v140 = vunpack.c.l.b16 %v59
  %v141 = vunpack.c.l.b16 %v60
  %v142 = vpack.c.b16 %v111, %v110
  %v143 = vpack.c.b16 %v113, %v112
  %v144 = vpack.c.b16 %v115, %v114
  %v145 = vpack.c.b16 %v117, %v116
  %v146 = vpack.c.b16 %v119, %v118
  %v147 = vpack.c.b16 %v121, %v120
  %v148 = vpack.c.b16 %v123, %v122
  %v149 = vpack.c.b16 %v125, %v124
  %v150 = vpack.c.b16 %v127, %v126
  %v151 = vpack.c.b16 %v129, %v128
  %v152 = vpack.c.b16 %v131, %v130
  %v153 = vpack.c.b16 %v133, %v132
  %v154 = vpack.c.b16 %v135, %v134
  %v155 = vpack.c.b16 %v137, %v136
  %v156 = vpack.c.b16 %v139, %v138
  %v157 = vpack.c.b16 %v141, %v140
  %174 = vmatprep.subr.bf16.mxu0 0
  %175 = vmatpush1.bf16.msra.mxu0 %v142
  %176 = vmatprep.subr.bf16.mxu0 0
  %177 = vmatpush1.bf16.msra.mxu0 %v143
  %178 = vmatprep.subr.bf16.mxu0 0
  %179 = vmatpush1.bf16.msra.mxu0 %v144
  %180 = vmatprep.subr.bf16.mxu0 0
  %181 = vmatpush1.bf16.msra.mxu0 %v145
  %182 = vmatprep.subr.bf16.mxu0 0
  %183 = vmatpush1.bf16.msra.mxu0 %v146
  %184 = vmatprep.subr.bf16.mxu0 0
  %185 = vmatpush1.bf16.msra.mxu0 %v147
  %186 = vmatprep.subr.bf16.mxu0 0
  %187 = vmatpush1.bf16.msra.mxu0 %v148
  %188 = vmatprep.subr.bf16.mxu0 0
  %189 = vmatpush1.bf16.msra.mxu0 %v149
  %190 = vmatprep.subr.bf16.mxu0 0
  %191 = vmatpush1.bf16.msra.mxu0 %v150
  %192 = vmatprep.subr.bf16.mxu0 0
  %193 = vmatpush1.bf16.msra.mxu0 %v151
  %194 = vmatprep.subr.bf16.mxu0 0
  %195 = vmatpush1.bf16.msra.mxu0 %v152
  %196 = vmatprep.subr.bf16.mxu0 0
  %197 = vmatpush1.bf16.msra.mxu0 %v153
  %198 = vmatprep.subr.bf16.mxu0 0
  %199 = vmatpush1.bf16.msra.mxu0 %v154
  %200 = vmatprep.subr.bf16.mxu0 0
  %201 = vmatpush1.bf16.msra.mxu0 %v155
  %202 = vmatprep.subr.bf16.mxu0 0
  %203 = vmatpush1.bf16.msra.mxu0 %v156
  %204 = vmatprep.subr.bf16.mxu0 0
  %205 = vmatpush1.bf16.msra.mxu0 %v157
  %206 = vmatprep.mubr.bf16.mxu0 %v75
  %207 = vmatmul.mubr.bf16.gmra.mrb[0].mxu0 %v74
  %v208 = vpop.f32.mrb[0].mxu0
  %v209 = vadd.f32 %v66, %v208
  %v210 = vpop.f32.mrb[0].mxu0
  %v211 = vpop.f32.mrb[0].mxu0
  %v212 = vadd.f32 %v66, %v211
  %v213 = vpop.f32.mrb[0].mxu0
  %214 = vdwg.mxu0
  %v215 = vmax.f32 %v209, 0.0
  %v216 = vmax.f32 %v212, 0.0
  %v217 = vpack.c.bf16 %v216, %v215
  %v218 = vld [vmem:[%s3] sm:$0xf]
  %v219 = vld [vmem:[%s3 + $0x4] sm:$0xf]
  %v220 = vld [vmem:[%s3 + $0x8] sm:$0xf]
  %v221 = vld [vmem:[%s3 + $0xc] sm:$0xf]
  %v222 = vld [vmem:[%s3 + $0x10] sm:$0xf]
  %v223 = vld [vmem:[%s3 + $0x14] sm:$0xf]
  %v224 = vld [vmem:[%s3 + $0x18] sm:$0xf]
  %v225 = vld [vmem:[%s3 + $0x1c] sm:$0xf]
  %v226 = vld [vmem:[%s3 + $0x20] sm:$0xf]
  %v227 = vld [vmem:[%s3 + $0x24] sm:$0xf]
  %v228 = vld [vmem:[%s3 + $0x28] sm:$0xf]
  %v229 = vld [vmem:[%s3 + $0x2c] sm:$0xf]
  %v230 = vld [vmem:[%s3 + $0x30] sm:$0xf]
  %v231 = vld [vmem:[%s3 + $0x34] sm:$0xf]
  %v232 = vld [vmem:[%s3 + $0x38] sm:$0xf]
  %v233 = vld [vmem:[%s3 + $0x3c] sm:$0xf]
  %v234 = vld [vmem:[%s4] sm:$0x1]
  %v236 = vlaneseq
  %v237 = vshrl.u32 %v236, 7
  %v238 = vsub.s32 0, %v237
  %v239 = vrot.slane %v234, %v238
  %v257 = vunpack.c.l.b16 %v218
  %v258 = vunpack.c.l.b16 %v219
  %v259 = vunpack.c.l.b16 %v220
  %v260 = vunpack.c.l.b16 %v221
  %v261 = vunpack.c.l.b16 %v222
  %v262 = vunpack.c.l.b16 %v223
  %v263 = vunpack.c.l.b16 %v224
  %v264 = vunpack.c.l.b16 %v225
  %v265 = vunpack.c.l.b16 %v226
  %v266 = vunpack.c.l.b16 %v227
  %v267 = vunpack.c.l.b16 %v228
  %v268 = vunpack.c.l.b16 %v229
  %v269 = vunpack.c.l.b16 %v230
  %v270 = vunpack.c.l.b16 %v231
  %v271 = vunpack.c.l.b16 %v232
  %v272 = vunpack.c.l.b16 %v233
  %v273 = vpack.c.b16 %v258, %v257
  %v274 = vpack.c.b16 %v260, %v259
  %v275 = vpack.c.b16 %v262, %v261
  %v276 = vpack.c.b16 %v264, %v263
  %v277 = vpack.c.b16 %v266, %v265
  %v278 = vpack.c.b16 %v268, %v267
  %v279 = vpack.c.b16 %v270, %v269
  %v280 = vpack.c.b16 %v272, %v271
  %289 = vmatprep.subr.bf16.mxu0 0
  %290 = vmatpush1.bf16.msra.mxu0 %v273
  %291 = vmatprep.subr.bf16.mxu0 0
  %292 = vmatpush1.bf16.msra.mxu0 %v274
  %293 = vmatprep.subr.bf16.mxu0 0
  %294 = vmatpush1.bf16.msra.mxu0 %v275
  %295 = vmatprep.subr.bf16.mxu0 0
  %296 = vmatpush1.bf16.msra.mxu0 %v276
  %297 = vmatprep.subr.bf16.mxu0 0
  %298 = vmatpush1.bf16.msra.mxu0 %v277
  %299 = vmatprep.subr.bf16.mxu0 0
  %300 = vmatpush1.bf16.msra.mxu0 %v278
  %301 = vmatprep.subr.bf16.mxu0 0
  %302 = vmatpush1.bf16.msra.mxu0 %v279
  %303 = vmatprep.subr.bf16.mxu0 0
  %304 = vmatpush1.bf16.msra.mxu0 %v280
  %305 = vmatprep.subr.bf16.mxu0 0
  %306 = vmatpush1.bf16.msra.mxu0 0
  %307 = vmatprep.subr.bf16.mxu0 0
  %308 = vmatpush1.bf16.msra.mxu0 0
  %309 = vmatprep.subr.bf16.mxu0 0
  %310 = vmatpush1.bf16.msra.mxu0 0
  %311 = vmatprep.subr.bf16.mxu0 0
  %312 = vmatpush1.bf16.msra.mxu0 0
  %313 = vmatprep.subr.bf16.mxu0 0
  %314 = vmatpush1.bf16.msra.mxu0 0
  %315 = vmatprep.subr.bf16.mxu0 0
  %316 = vmatpush1.bf16.msra.mxu0 0
  %317 = vmatprep.subr.bf16.mxu0 0
  %318 = vmatpush1.bf16.msra.mxu0 0
  %319 = vmatprep.subr.bf16.mxu0 0
  %320 = vmatpush1.bf16.msra.mxu0 0
  %321 = vmatprep.mubr.bf16.mxu0 0
  %322 = vmatmul.mubr.bf16.gmra.mrb[0].mxu0 %v217
  %v323 = vpop.f32.mrb[0].mxu0
  %v324 = vadd.f32 %v239, %v323
  %v325 = vpop.f32.mrb[0].mxu0
  %v326 = vpop.f32.mrb[0].mxu0
  %v327 = vadd.f32 %v239, %v326
  %v328 = vpop.f32.mrb[0].mxu0
  %329 = vdwg.mxu0
  %v330 = vmax.f32 %v324, 0.0
  %v331 = vmax.f32 %v327, 0.0
  %v332 = vmul.f32 %v330, %v330
  %v333 = vmul.f32 %v331, %v331
  %334 = vadd.xlane.f32.xlu0 %v332
  %v335 = vpop.xlane.xlu0 %334
  %336 = vadd.xlane.f32.xlu0 %v333
  %v337 = vpop.xlane.xlu0 %336
  %v338 = vmax.f32 %v335, 1e-24
  %v339 = vmax.f32 %v337, 1e-24
  %v340 = vrsqrt.pop %v338
  %v341 = vrsqrt.pop %v339
  %v342 = vmul.f32 %v330, %v340
  %v343 = vmul.f32 %v331, %v341
  %v344 = vpack.c.bf16 %v343, %v342
  %v345 = vld [vmem:[%s5] sm:$0xf]
  %v346 = vld [vmem:[%s5 + $0x4] sm:$0xf]
  %v347 = vld [vmem:[%s5 + $0x8] sm:$0xf]
  %v348 = vld [vmem:[%s5 + $0xc] sm:$0xf]
  %v349 = vld [vmem:[%s5 + $0x10] sm:$0xf]
  %v350 = vld [vmem:[%s5 + $0x14] sm:$0xf]
  %v351 = vld [vmem:[%s5 + $0x18] sm:$0xf]
  %v352 = vld [vmem:[%s5 + $0x1c] sm:$0xf]
  %v353 = vld [vmem:[%s5 + $0x20] sm:$0xf]
  %v354 = vld [vmem:[%s5 + $0x24] sm:$0xf]
  %v355 = vld [vmem:[%s5 + $0x28] sm:$0xf]
  %v356 = vld [vmem:[%s5 + $0x2c] sm:$0xf]
  %v357 = vld [vmem:[%s5 + $0x30] sm:$0xf]
  %v358 = vld [vmem:[%s5 + $0x34] sm:$0xf]
  %v359 = vld [vmem:[%s5 + $0x38] sm:$0xf]
  %v360 = vld [vmem:[%s5 + $0x3c] sm:$0xf]
  %v361 = vld [vmem:[%s6] sm:$0x1]
  %v363 = vlaneseq
  %v364 = vshrl.u32 %v363, 7
  %v365 = vsub.s32 0, %v364
  %v366 = vrot.slane %v361, %v365
  %v384 = vunpack.c.l.b16 %v345
  %v385 = vunpack.c.l.b16 %v346
  %v386 = vunpack.c.l.b16 %v347
  %v387 = vunpack.c.l.b16 %v348
  %v388 = vunpack.c.l.b16 %v349
  %v389 = vunpack.c.l.b16 %v350
  %v390 = vunpack.c.l.b16 %v351
  %v391 = vunpack.c.l.b16 %v352
  %v392 = vunpack.c.l.b16 %v353
  %v393 = vunpack.c.l.b16 %v354
  %v394 = vunpack.c.l.b16 %v355
  %v395 = vunpack.c.l.b16 %v356
  %v396 = vunpack.c.l.b16 %v357
  %v397 = vunpack.c.l.b16 %v358
  %v398 = vunpack.c.l.b16 %v359
  %v399 = vunpack.c.l.b16 %v360
  %v400 = vpack.c.b16 %v385, %v384
  %v401 = vpack.c.b16 %v387, %v386
  %v402 = vpack.c.b16 %v389, %v388
  %v403 = vpack.c.b16 %v391, %v390
  %v404 = vpack.c.b16 %v393, %v392
  %v405 = vpack.c.b16 %v395, %v394
  %v406 = vpack.c.b16 %v397, %v396
  %v407 = vpack.c.b16 %v399, %v398
  %416 = vmatprep.subr.bf16.mxu0 0
  %417 = vmatpush1.bf16.msra.mxu0 %v400
  %418 = vmatprep.subr.bf16.mxu0 0
  %419 = vmatpush1.bf16.msra.mxu0 %v401
  %420 = vmatprep.subr.bf16.mxu0 0
  %421 = vmatpush1.bf16.msra.mxu0 %v402
  %422 = vmatprep.subr.bf16.mxu0 0
  %423 = vmatpush1.bf16.msra.mxu0 %v403
  %424 = vmatprep.subr.bf16.mxu0 0
  %425 = vmatpush1.bf16.msra.mxu0 %v404
  %426 = vmatprep.subr.bf16.mxu0 0
  %427 = vmatpush1.bf16.msra.mxu0 %v405
  %428 = vmatprep.subr.bf16.mxu0 0
  %429 = vmatpush1.bf16.msra.mxu0 %v406
  %430 = vmatprep.subr.bf16.mxu0 0
  %431 = vmatpush1.bf16.msra.mxu0 %v407
  %432 = vmatprep.subr.bf16.mxu0 0
  %433 = vmatpush1.bf16.msra.mxu0 0
  %434 = vmatprep.subr.bf16.mxu0 0
  %435 = vmatpush1.bf16.msra.mxu0 0
  %436 = vmatprep.subr.bf16.mxu0 0
  %437 = vmatpush1.bf16.msra.mxu0 0
  %438 = vmatprep.subr.bf16.mxu0 0
  %439 = vmatpush1.bf16.msra.mxu0 0
  %440 = vmatprep.subr.bf16.mxu0 0
  %441 = vmatpush1.bf16.msra.mxu0 0
  %442 = vmatprep.subr.bf16.mxu0 0
  %443 = vmatpush1.bf16.msra.mxu0 0
  %444 = vmatprep.subr.bf16.mxu0 0
  %445 = vmatpush1.bf16.msra.mxu0 0
  %446 = vmatprep.subr.bf16.mxu0 0
  %447 = vmatpush1.bf16.msra.mxu0 0
  %448 = vmatprep.mubr.bf16.mxu0 0
  %449 = vmatmul.mubr.bf16.gmra.mrb[0].mxu0 %v344
  %v450 = vpop.f32.mrb[0].mxu0
  %v451 = vadd.f32 %v366, %v450
  %v452 = vpop.f32.mrb[0].mxu0
  %v453 = vpop.f32.mrb[0].mxu0
  %v454 = vadd.f32 %v366, %v453
  %v455 = vpop.f32.mrb[0].mxu0
  %456 = vdwg.mxu0
  %v457 = vmul.f32 %v451, %v451
  %v458 = vmul.f32 %v454, %v454
  %459 = vadd.xlane.f32.xlu0 %v457
  %v460 = vpop.xlane.xlu0 %459
  %461 = vadd.xlane.f32.xlu0 %v458
  %v462 = vpop.xlane.xlu0 %461
  %v463 = vmax.f32 %v460, 1e-24
  %v464 = vmax.f32 %v462, 1e-24
  %v465 = vrsqrt.pop %v463
  %v466 = vrsqrt.pop %v464
  %v467 = vmul.f32 %v451, %v465
  %v468 = vmul.f32 %v454, %v466
  %469 = vst [vmem:[%s7] sm:$0xff] %v467
  %470 = vst [vmem:[%s7 + $0x8] sm:$0xff] %v468
  // Predicated region
  $region30: #{encoder_image_full_forward.1} parent=0 // pred_check
    _
  $region31: #{encoder_image_full_forward.1} parent=0 // pred_check_branch
    %472 = sbr.rel (0) target = $region33
  $region32: #{encoder_image_full_forward.1} parent=0 // pred_region
    _
  $region33: #{encoder_image_full_forward.1} parent=0 // pred_fallthru
    _
  // Predicated region
  $region34: #{encoder_image_full_forward.1} parent=0 // pred_check
    _
  $region35: #{encoder_image_full_forward.1} parent=0 // pred_check_branch
    %474 = sbr.rel (0) target = $region37
  $region36: #{encoder_image_full_forward.1} parent=0 // pred_region
    _
  $region37: #{encoder_image_full_forward.1} parent=0 // pred_fallthru
    _

</llo_original>
